<compile_context>
chip_gen: v5e
topology: v5e:2x2
jax: 0.10.0
libtpu: 0.0.40
codegen_flags: <defaults>
</compile_context>

<pallas_src>
import functools

import jax
import jax.numpy as jnp
from jax.experimental import pallas as pl
from jax.experimental.pallas import tpu as pltpu


def _round_up(x, m):
    return ((x + m - 1) // m) * m


def _vmem_capacity_bytes():
    """Per-TensorCore VMEM capacity, with a conservative fallback."""
    try:
        return int(pltpu.get_tpu_info().vmem_capacity_bytes)
    except Exception:
        return 64 * 1024 * 1024  # v7x has the smallest VMEM (64 MiB / TC)


# -----------------------------------------------------------------------------
# Fast path: table resident in VMEM, gather with dynamic vector loads/stores.
# -----------------------------------------------------------------------------
def _gather_rows_vmem_kernel(batch_tile, idx_ref, table_ref, out_ref):
    """out_ref[r, :] = table_ref[idx[base + r], :] for r in [0, batch_tile)."""
    base = pl.program_id(0) * batch_tile

    @pl.loop(0, batch_tile)
    def _(r):
        row = idx_ref[base + r]                       # scalar read from SMEM
        out_ref[pl.ds(r, 1), :] = table_ref[pl.ds(row, 1), :]


# -----------------------------------------------------------------------------
# Slow path: table stays in HBM, per-row DMAs through a bounded window.
# -----------------------------------------------------------------------------
def _gather_rows_hbm_kernel(batch_tile, window, idx_ref, table_hbm, out_ref, sem):
    base = pl.program_id(0) * batch_tile

    def row_copy(r, slot):
        row = idx_ref[base + r]
        return pltpu.make_async_copy(
            table_hbm.at[pl.ds(row, 1), :],           # (1, D_pad) row in HBM
            out_ref.at[pl.ds(r, 1), :],               # (1, D_pad) row of VMEM block
            sem.at[slot],
        )

    # Prime the in-flight window (static; `window` is small, e.g. 8).
    for r in range(window):
        row_copy(r, r).start()

    # Steady state: retire the oldest copy, immediately reuse its slot.
    if batch_tile > window:
        @pl.loop(0, batch_tile - window)
        def _(r):
            slot = r & (window - 1)
            row_copy(r, slot).wait()
            row_copy(r + window, slot).start()

    # Drain: every outstanding copy must complete before the block writes back.
    for r in range(batch_tile - window, batch_tile):
        row_copy(r, r & (window - 1)).wait()


def package2vec_forward(
    in_idxs,
    embed_in_weight,
    *,
    batch_tile=128,
    dma_window=8,
    table_vmem_budget_bytes=None,
):
    """Pallas implementation of Package2Vec.forward (embedding row gather).

    Args:
      in_idxs: (B,) integer token indices.
      embed_in_weight: (V, D) embedding table.
      batch_tile: rows gathered per grid step (rounded to a multiple of 8).
      dma_window: max in-flight row DMAs on the HBM path (power of two).
      table_vmem_budget_bytes: override for the VMEM-resident-table gate
        (None -> derived from the chip's VMEM capacity; 0 -> force HBM path).
    Returns:
      (B, D) embeddings, matching nn.Embedding(in_idxs).
    """
    B = int(in_idxs.shape[0])
    V, D = map(int, embed_in_weight.shape)
    dtype = embed_in_weight.dtype
    itemsize = jnp.dtype(dtype).itemsize

    # --- lane-dense embedding dim -------------------------------------------
    D_pad = _round_up(D, 128)
    table = embed_in_weight
    if D_pad != D:
        table = jnp.pad(table, ((0, 0), (0, D_pad - D)))

    # nn.Embedding raises on out-of-range indices; clamp so a bad index can
    # never become an out-of-bounds DMA / load on the table.
    idx = jnp.clip(in_idxs.astype(jnp.int32), 0, V - 1)

    # --- tile / grid selection -----------------------------------------------
    bt = min(int(batch_tile), _round_up(B, 8))
    if B >= 128:
        # Keep at least 2 grid steps so v7x can shard the batch over its 2 TCs.
        bt = min(bt, _round_up((B + 1) // 2, 8))
    bt = max(8, _round_up(bt, 8))

    B_pad = _round_up(B, bt)
    if B_pad != B:
        idx = jnp.concatenate([idx, jnp.zeros((B_pad - B,), jnp.int32)])
    grid = (B_pad // bt,)

    # --- VMEM budgeting -------------------------------------------------------
    vmem_cap = _vmem_capacity_bytes()
    if table_vmem_budget_bytes is None:
        # Leave ~1/3 of VMEM as headroom for output buffers / compiler scratch.
        table_vmem_budget_bytes = (2 * vmem_cap) // 3
    table_bytes = V * D_pad * itemsize
    out_block_bytes = bt * D_pad * itemsize
    # Conservatively assume the pipeline double-buffers both the (constant)
    # table block and the output block.
    fast_path_bytes = 2 * table_bytes + 4 * out_block_bytes
    use_vmem_table = fast_path_bytes <= table_vmem_budget_bytes

    if use_vmem_table:
        vmem_limit = int(min(vmem_cap, max(32 << 20, fast_path_bytes + (2 << 20))))
        out = pl.pallas_call(
            functools.partial(_gather_rows_vmem_kernel, bt),
            out_shape=jax.ShapeDtypeStruct((B_pad, D_pad), dtype),
            grid_spec=pltpu.PrefetchScalarGridSpec(
                num_scalar_prefetch=1,                 # indices land in SMEM
                grid=grid,
                in_specs=[
                    # Whole table, constant block index -> loaded once and
                    # kept VMEM-resident across every grid step.
                    pl.BlockSpec((V, D_pad), lambda i, idx_ref: (0, 0)),
                ],
                out_specs=pl.BlockSpec((bt, D_pad), lambda i, idx_ref: (i, 0)),
            ),
            compiler_params=pltpu.CompilerParams(
                dimension_semantics=("parallel",),
                vmem_limit_bytes=vmem_limit,
            ),
        )(idx, table)
    else:
        window = max(1, min(int(dma_window), bt))
        # Round down to a power of two so `r & (window - 1)` addresses slots.
        while window & (window - 1):
            window &= window - 1
        out = pl.pallas_call(
            functools.partial(_gather_rows_hbm_kernel, bt, window),
            out_shape=jax.ShapeDtypeStruct((B_pad, D_pad), dtype),
            grid_spec=pltpu.PrefetchScalarGridSpec(
                num_scalar_prefetch=1,                 # indices land in SMEM
                grid=grid,
                in_specs=[
                    # Table never touches VMEM; rows are DMA'd per index.
                    pl.BlockSpec(memory_space=pl.ANY),
                ],
                out_specs=pl.BlockSpec((bt, D_pad), lambda i, idx_ref: (i, 0)),
                scratch_shapes=[pltpu.SemaphoreType.DMA((window,))],
            ),
            compiler_params=pltpu.CompilerParams(
                dimension_semantics=("parallel",),
            ),
        )(idx, table)

    return out[:B, :D]


if __name__ == "__main__":
    # Small, deterministic synthetic configuration (Options analogue).
    vocab_size = 64
    embed_dim = 32     # padded to 128 lanes inside the wrapper
    batch = 96

    key = jax.random.PRNGKey(0)
    k_w_in, k_w_out, k_idx = jax.random.split(key, 3)

    # nn.Embedding weights initialized uniform(-1, 1), as in __init__.
    embed_in_weight = jax.random.uniform(
        k_w_in, (vocab_size, embed_dim), jnp.float32, minval=-1.0, maxval=1.0)
    # embed_out exists in the module but is unused by forward().
    embed_out_weight = jax.random.uniform(
        k_w_out, (vocab_size, embed_dim), jnp.float32, minval=-1.0, maxval=1.0)

    in_idxs = jax.random.randint(k_idx, (batch,), 0, vocab_size, dtype=jnp.int32)

    # Reference: plain JAX embedding lookup.
    ref = jnp.take(embed_in_weight, in_idxs, axis=0)

    # 1) Default config: large tile, VMEM-resident table fast path.
    out_fast = jax.block_until_ready(package2vec_forward(in_idxs, embed_in_weight))
    assert out_fast.shape == (batch, embed_dim)
    assert out_fast.dtype == jnp.float32
    assert jnp.array_equal(out_fast, ref), "VMEM fast path mismatch vs reference"

    # 2) Multi-step grid on the fast path.
    out_tiled = jax.block_until_ready(
        package2vec_forward(in_idxs, embed_in_weight, batch_tile=32))
    assert jnp.array_equal(out_tiled, ref), "tiled fast path mismatch vs reference"

    # 3) Force the HBM path (zero table budget) to exercise windowed row DMAs.
    out_hbm = jax.block_until_ready(
        package2vec_forward(in_idxs, embed_in_weight, batch_tile=32,
                            table_vmem_budget_bytes=0))
    assert jnp.array_equal(out_hbm, ref), "HBM DMA path mismatch vs reference"

    print("KERNEL_OK")
</pallas_src>

<mosaic_0001>
module attributes {stable_mosaic.version = 11 : i64} {
  func.func @_gather_rows_vmem_kernel(%arg0: i32, %arg1: memref<96xi32, #tpu.memory_space<smem>>, %arg2: memref<64x128xf32, #tpu.memory_space<vmem>>, %arg3: memref<96x128xf32, #tpu.memory_space<vmem>>) attributes {dimension_semantics = [#tpu.dimension_semantics<parallel>], iteration_bounds = array<i64: 1>, scalar_prefetch = 1 : i64, scratch_operands = 0 : i64, tpu.core_type = #tpu.core_type<tc>, window_params = [{pipeline_mode = #tpu.pipeline_mode<synchronous>, transform_indices = @transform_0, window_bounds = array<i64: 64, 128>}, {transform_indices = @transform_1, window_bounds = array<i64: 96, 128>}]} {
    %c96_i32 = arith.constant 96 : i32
    %0 = arith.muli %arg0, %c96_i32 : i32
    %c0_i32 = arith.constant 0 : i32
    %c96_i32_0 = arith.constant 96 : i32
    %1 = arith.addi %c0_i32, %c96_i32_0 : i32
    %c1_i32 = arith.constant 1 : i32
    scf.for %arg4 = %c0_i32 to %1 step %c1_i32  : i32 {
      %c1_i32_2 = arith.constant 1 : i32
      %2 = arith.muli %arg4, %c1_i32_2 : i32
      %c0_i32_3 = arith.constant 0 : i32
      %3 = arith.addi %c0_i32_3, %2 : i32
      %4 = arith.addi %0, %3 : i32
      %5 = arith.index_cast %4 : i32 to index
      %6 = memref.load %arg1[%5] : memref<96xi32, #tpu.memory_space<smem>>
      %7 = arith.index_cast %6 : i32 to index
      %c0 = arith.constant 0 : index
      %8 = vector.load %arg2[%7, %c0] : memref<64x128xf32, #tpu.memory_space<vmem>>, vector<1x128xf32>
      %9 = arith.index_cast %3 : i32 to index
      %c0_4 = arith.constant 0 : index
      %10 = vector.load %arg3[%9, %c0_4] : memref<96x128xf32, #tpu.memory_space<vmem>>, vector<1x128xf32>
      tpu.vector_store %arg3[%9, %c0_4], %8 {strides = array<i32>} : memref<96x128xf32, #tpu.memory_space<vmem>>, vector<1x128xf32>,
    }
    %c96_i32_1 = arith.constant 96 : i32
    return
  }
  func.func @transform_0(%arg0: i32, %arg1: memref<96xi32, #tpu.memory_space<smem>>) -> (i32, i32) {
    %c0_i32 = arith.constant 0 : i32
    %c0_i32_0 = arith.constant 0 : i32
    %c0_i32_1 = arith.constant 0 : i32
    return %c0_i32, %c0_i32_0 : i32, i32
  }
  func.func @transform_1(%arg0: i32, %arg1: memref<96xi32, #tpu.memory_space<smem>>) -> (i32, i32) {
    %c0_i32 = arith.constant 0 : i32
    %c0_i32_0 = arith.constant 0 : i32
    return %arg0, %c0_i32 : i32, i32
  }
}

</mosaic_0001>

<llo_original>
// kernel: tpu_custom_call.1
$region0: #{tpu_custom_call.1}
  #allocation0 [shape = 'u32[]', space=smem, size = 0x4, offset = 0x4, fixed_abs, tag = 'smem constant byte address 0x4 - core index']
  #allocation1 [shape = 'u32[72,128]{1,0:T(1,128)}', space=vmem, size = 0x9000, scoped, tag = 'internal scratch']
  #allocation2 [shape = 's32[1]{0}', space=sflag, size = 0x4, scoped, tag = 'scoped memory for tpu_custom_call.1']
  #allocation3 [shape = 'u8[512]{0}', space=smem, size = 0x200, scoped, tag = 'prefetched SMEM operand 0']
  %s0 = inlined_call_operand.hbm [shape: s32[96], index: 0, kind: input, shape index: {}]
  %s1 = inlined_call_operand.hbm [shape: f32[64,128], index: 1, kind: input, shape index: {}]
  %s2 = inlined_call_operand.hbm [shape: f32[96,128], index: 2, kind: output, shape index: {}]
  %s3 = sld [smem:[#allocation0]]
  $region25: #{tpu_custom_call.1} parent=0
    _
  %s5 = ssub.s32 1, %s3
  %s6 = scalar_select 0, %s5, %s3
  %s8 = sshll.u32 %s0, 4
  %s9 = int_to_ptr.hbm [resolvable:$true] %s8
  %11 = dma.hbm_to_smem %s9, 16, [#allocation3], [#allocation2]
  %13 = dma.done [#allocation2], 16
  %14 = sfence
  $region1: #{tpu_custom_call.1} parent=0
    #allocation4 [shape = 'u8[32768]{0}', space=vmem, size = 0x8000, scoped, tag = 'input window, operand 1, single buffered']
    #allocation5 [shape = 's32[1]{0}', space=sflag, size = 0x4, scoped, tag = 'scoped memory for tpu_custom_call.1']
    #allocation6 [shape = 's32[1]{0}', space=sflag, size = 0x4, scoped, tag = 'scoped memory for tpu_custom_call.1']
    #allocation7 [shape = 'u8[49152]{0}', space=vmem, size = 0xc000, scoped, tag = 'output window, operand 0, single buffered']
    %15 = vsyncpa [#allocation5], 0
    %16 = vsyncpa [#allocation6], 0
    // Predicated region
    $region2: #{tpu_custom_call.1} parent=1 // pred_check
      _
    $region3: #{tpu_custom_call.1} parent=1 // pred_check_branch
      %18 = sbr.rel (0) target = $region5
    $region4: #{tpu_custom_call.1} parent=1 // pred_region
      %20 = vsyncadd [#allocation5], 0
      %s21 = sshll.u32 %s1, 4
      %s22 = int_to_ptr.hbm [resolvable:$true] %s21
      %s23 = sshll.u32 [#allocation4], 4
      %s24 = int_to_ptr.vmem [resolvable:$true] %s23
      %29 = dma.hbm_to_vmem [thread:$0]  %s22, 1024, %s24, [#allocation5], 128, 128, 8
    $region5: #{tpu_custom_call.1} parent=1 // pred_fallthru
      _
    // Predicated region
    $region6: #{tpu_custom_call.1} parent=1 // pred_check
      _
    $region7: #{tpu_custom_call.1} parent=1 // pred_check_branch
      %31 = sbr.rel (0) target = $region9
    $region8: #{tpu_custom_call.1} parent=1 // pred_region
      %33 = dma.done [#allocation5], 1024
    $region9: #{tpu_custom_call.1} parent=1 // pred_fallthru
      _
    %s34 = smul.u32 0, 96
    loop: start=0, step=1, limit=96
    $region10: #{tpu_custom_call.1} parent=1 // loop_pre_header
      _
    $region11: #{tpu_custom_call.1} parent=1 // loop_header
      %s36 = sphi 0, %s40
      %p37 = scmp.ge.s32.totalorder %s36, 96
    $region12: #{tpu_custom_call.1} parent=1 // loop_header_branch
      %39 = sbr.rel (%p37) target = $region16
    $region13: #{tpu_custom_call.1} parent=1 // loop_body
      %s41 = sadd.s32 %s34, %s36
      %s42 = sld [smem:[#allocation3 + %s41]]
      %s43 = scalar_lea.vmem [#allocation4], %s42
      %v44 = vld [vmem:[%s43] sm:$0x1]
      %s45 = scalar_lea.vmem [#allocation7], %s36
      %46 = vst [vmem:[%s45] sm:$0x1] %v44
    $region14: #{tpu_custom_call.1} parent=1 // loop_footer
      %s40 = sadd.s32 1, %s36
    $region15: #{tpu_custom_call.1} parent=1 // loop_footer_branch
      %35 = sbr.rel target = $region11
    $region16: #{tpu_custom_call.1} parent=1 // loop_exit
      _
    // Predicated region
    $region17: #{tpu_custom_call.1} parent=1 // pred_check
      _
    $region18: #{tpu_custom_call.1} parent=1 // pred_check_branch
      %48 = sbr.rel (0) target = $region20
    $region19: #{tpu_custom_call.1} parent=1 // pred_region
      %50 = vsyncadd [#allocation6], 0
      %s51 = sshll.u32 [#allocation7], 4
      %s52 = int_to_ptr.vmem [resolvable:$true] %s51
      %s53 = sshll.u32 %s2, 4
      %s54 = int_to_ptr.hbm [resolvable:$true] %s53
      %59 = dma.vmem_to_hbm [thread:$0]  %s52, 1536, %s54, [#allocation6], 128, 128, 8
    $region20: #{tpu_custom_call.1} parent=1 // pred_fallthru
      _
    // Predicated region
    $region21: #{tpu_custom_call.1} parent=1 // pred_check
      _
    $region22: #{tpu_custom_call.1} parent=1 // pred_check_branch
      %61 = sbr.rel (0) target = $region24
    $region23: #{tpu_custom_call.1} parent=1 // pred_region
      %63 = dma.done [#allocation6], 1536
    $region24: #{tpu_custom_call.1} parent=1 // pred_fallthru
      _
    %64 = vsyncpa [#allocation5], 1
    %65 = vsyncpa [#allocation6], 1

</llo_original>
